<compile_context>
chip_gen: v5e
topology: v5e:2x2
jax: 0.10.0
libtpu: 0.0.40
codegen_flags: <defaults>
</compile_context>

<pallas_src>
import functools

import jax
import jax.numpy as jnp
from jax.experimental import pallas as pl
from jax.experimental.pallas import tpu as pltpu


def conv_in_div_kernel(x_ref, w_ref, mask_ref, o_ref, *,
                       Nb, HW, W_img, KH, KW, inv_P, eps, inv_div):
    """One block of Nb images per grid step.

    x_ref    : (C, Nb*HW)      VMEM  raw images, flattened H*W, lane-dense
    w_ref    : (OC, KH*KW*C)   VMEM  conv weights, tap-major flattening
    mask_ref : (1, HW)         VMEM  1.0 where (ho < Ho) & (wo < Wo), else 0.0
    o_ref    : (Nb, OC, HW)    VMEM  normalized output (invalid lanes are junk)
    """
    L = Nb * HW
    x = x_ref[...]                                        # (C, L)

    # ---- in-VMEM im2col: KH*KW lane rolls of the flattened image block ----
    parts = []
    for kh in range(KH):
        for kw in range(KW):
            s = kh * W_img + kw                           # flat tap offset
            parts.append(x if s == 0 else pltpu.roll(x, shift=L - s, axis=1))
    patches = jnp.concatenate(parts, axis=0)              # (KH*KW*C, L)

    # ---- convolution: one MXU matmul for the whole block ----
    conv = jnp.dot(w_ref[...], patches,
                   preferred_element_type=jnp.float32)    # (OC, L)

    mask = mask_ref[...]                                  # (1, HW)

    # ---- instance norm + divide, per image (VPU/XLU only; matmul hoisted) ----
    for n in range(Nb):                                   # small static loop
        c_n = conv[:, n * HW:(n + 1) * HW]                # (OC, HW), 128-aligned slice
        mean = jnp.sum(c_n * mask, axis=-1, keepdims=True) * inv_P      # (OC, 1)
        cent = c_n - mean
        var = jnp.sum(cent * cent * mask, axis=-1, keepdims=True) * inv_P
        scale = jax.lax.rsqrt(var + eps) * inv_div        # divide folded into scale
        o_ref[n] = (cent * scale).astype(o_ref.dtype)     # lane-dense (OC, HW) store


def _pick_batch_block(N, max_nb=8, min_steps=4):
    """Largest divisor of N that is <= max_nb and leaves >= min_steps grid steps."""
    best = 1
    for nb in range(1, min(N, max_nb) + 1):
        if N % nb == 0 and (N // nb) >= min_steps:
            best = nb
    return best


def conv_instnorm_div(x, w, b=None, *, divide_by=2.0, eps=1e-5):
    # NOTE: the conv bias cancels exactly under InstanceNorm(affine=False)
    # (a per-channel constant is removed by the spatial mean), so it is ignored.
    del b
    N, C, H, W = x.shape
    OC, Cw, KH, KW = w.shape
    assert Cw == C
    Ho, Wo = H - KH + 1, W - KW + 1
    HW = H * W
    P = Ho * Wo

    Nb = _pick_batch_block(N)
    assert (Nb * HW) % 128 == 0 or Nb == N, "flattened spatial block must be lane-aligned"
    # TODO(synk): pad H*W up to a multiple of 128 in the wrapper for odd spatial sizes.

    # Lane-dense image layout: x_t[c, n*HW + h*W + w] = x[n, c, h, w]  (tiny HBM pass).
    x_t = x.astype(jnp.float32).transpose(1, 0, 2, 3).reshape(C, N * HW)
    # Tap-major weight flattening matching the in-kernel im2col row order (t*C + c).
    w_flat = w.astype(jnp.float32).transpose(0, 2, 3, 1).reshape(OC, KH * KW * C)
    # Validity mask over one image's flattened H*W positions.
    hh, ww = jnp.meshgrid(jnp.arange(H), jnp.arange(W), indexing="ij")
    mask = ((hh < Ho) & (ww < Wo)).astype(jnp.float32).reshape(1, HW)

    grid = (N // Nb,)
    kernel = functools.partial(
        conv_in_div_kernel, Nb=Nb, HW=HW, W_img=W, KH=KH, KW=KW,
        inv_P=1.0 / P, eps=eps, inv_div=1.0 / divide_by)

    out_flat = pl.pallas_call(
        kernel,
        out_shape=jax.ShapeDtypeStruct((N, OC, HW), x.dtype),
        grid=grid,
        in_specs=[
            pl.BlockSpec((C, Nb * HW), lambda i: (0, i)),        # images (lane-dense)
            pl.BlockSpec((OC, KH * KW * C), lambda i: (0, 0)),   # weights in VMEM
            pl.BlockSpec((1, HW), lambda i: (0, 0)),             # validity mask
        ],
        out_specs=pl.BlockSpec((Nb, OC, HW), lambda i: (i, 0, 0)),
        compiler_params=pltpu.CompilerParams(dimension_semantics=("parallel",)),
    )(x_t, w_flat, mask)

    # (N, OC, H*W) -> (N, OC, H, W) -> valid window (N, OC, Ho, Wo)
    return out_flat.reshape(N, OC, H, W)[:, :, :Ho, :Wo]


if __name__ == "__main__":
    # Module config from the PyTorch reference.
    in_channels, out_channels, kernel_size, divide_by = 3, 16, 3, 2.0

    # Small deterministic inputs: batch=8 (gives a 4-step grid), spatial=16.
    key = jax.random.PRNGKey(0)
    kx, kw, kb = jax.random.split(key, 3)
    N, H, W = 8, 16, 16
    x = jax.random.normal(kx, (N, in_channels, H, W), dtype=jnp.float32)

    # Deterministic Conv2d parameter init (PyTorch-style uniform bound).
    fan_in = in_channels * kernel_size * kernel_size
    bound = 1.0 / (fan_in ** 0.5)
    w = jax.random.uniform(kw, (out_channels, in_channels, kernel_size, kernel_size),
                           minval=-bound, maxval=bound, dtype=jnp.float32)
    b = jax.random.uniform(kb, (out_channels,),
                           minval=-bound, maxval=bound, dtype=jnp.float32)

    out = conv_instnorm_div(x, w, b, divide_by=divide_by)
    out = jax.block_until_ready(out)

    # Pure-JAX reference (includes the bias, which cancels under InstanceNorm).
    conv_ref = jax.lax.conv_general_dilated(
        x, w, window_strides=(1, 1), padding="VALID",
        dimension_numbers=("NCHW", "OIHW", "NCHW")) + b[None, :, None, None]
    mean = conv_ref.mean(axis=(2, 3), keepdims=True)
    var = ((conv_ref - mean) ** 2).mean(axis=(2, 3), keepdims=True)
    ref = (conv_ref - mean) / jnp.sqrt(var + 1e-5) / divide_by

    assert out.shape == ref.shape == (N, out_channels, H - 2, W - 2)
    err = float(jnp.abs(out - ref).max())
    assert jnp.allclose(out, ref, atol=1e-4, rtol=1e-4), err
    print("KERNEL_OK")
</pallas_src>

<mosaic_0001>
module attributes {stable_mosaic.version = 11 : i64} {
  func.func @conv_in_div_kernel(%arg0: i32, %arg1: memref<3x512xf32, #tpu.memory_space<vmem>>, %arg2: memref<16x27xf32, #tpu.memory_space<vmem>>, %arg3: memref<1x256xf32, #tpu.memory_space<vmem>>, %arg4: memref<2x16x256xf32, #tpu.memory_space<vmem>>) attributes {dimension_semantics = [#tpu.dimension_semantics<parallel>], iteration_bounds = array<i64: 4>, scalar_prefetch = 0 : i64, scratch_operands = 0 : i64, tpu.core_type = #tpu.core_type<tc>, window_params = [{transform_indices = @transform_0, window_bounds = array<i64: 3, 512>}, {pipeline_mode = #tpu.pipeline_mode<synchronous>, transform_indices = @transform_1, window_bounds = array<i64: 16, 27>}, {pipeline_mode = #tpu.pipeline_mode<synchronous>, transform_indices = @transform_2, window_bounds = array<i64: 1, 256>}, {transform_indices = @transform_3, window_bounds = array<i64: 2, 16, 256>}]} {
    %c0 = arith.constant 0 : index
    %c0_0 = arith.constant 0 : index
    %0 = vector.load %arg1[%c0, %c0_0] : memref<3x512xf32, #tpu.memory_space<vmem>>, vector<3x512xf32>
    %c511_i32 = arith.constant 511 : i32
    %1 = tpu.dynamic_rotate %0 by %c511_i32 dim 1 : vector<3x512xf32>, i32 -> vector<3x512xf32>
    %c510_i32 = arith.constant 510 : i32
    %2 = tpu.dynamic_rotate %0 by %c510_i32 dim 1 : vector<3x512xf32>, i32 -> vector<3x512xf32>
    %c496_i32 = arith.constant 496 : i32
    %3 = tpu.dynamic_rotate %0 by %c496_i32 dim 1 : vector<3x512xf32>, i32 -> vector<3x512xf32>
    %c495_i32 = arith.constant 495 : i32
    %4 = tpu.dynamic_rotate %0 by %c495_i32 dim 1 : vector<3x512xf32>, i32 -> vector<3x512xf32>
    %c494_i32 = arith.constant 494 : i32
    %5 = tpu.dynamic_rotate %0 by %c494_i32 dim 1 : vector<3x512xf32>, i32 -> vector<3x512xf32>
    %c480_i32 = arith.constant 480 : i32
    %6 = tpu.dynamic_rotate %0 by %c480_i32 dim 1 : vector<3x512xf32>, i32 -> vector<3x512xf32>
    %c479_i32 = arith.constant 479 : i32
    %7 = tpu.dynamic_rotate %0 by %c479_i32 dim 1 : vector<3x512xf32>, i32 -> vector<3x512xf32>
    %c478_i32 = arith.constant 478 : i32
    %8 = tpu.dynamic_rotate %0 by %c478_i32 dim 1 : vector<3x512xf32>, i32 -> vector<3x512xf32>
    %9 = tpu.concatenate %0, %1, %2, %3, %4, %5, %6, %7, %8 in 0 : vector<3x512xf32>, vector<3x512xf32>, vector<3x512xf32>, vector<3x512xf32>, vector<3x512xf32>, vector<3x512xf32>, vector<3x512xf32>, vector<3x512xf32>, vector<3x512xf32> -> vector<27x512xf32>
    %c0_1 = arith.constant 0 : index
    %c0_2 = arith.constant 0 : index
    %10 = vector.load %arg2[%c0_1, %c0_2] : memref<16x27xf32, #tpu.memory_space<vmem>>, vector<16x27xf32>
    %cst = arith.constant dense<0.000000e+00> : vector<16x512xf32>
    %11 = tpu.matmul %10, %9, %cst {dimension_numbers = #tpu.dot_dimension_numbers<[1], [0], [0], [1], [0, 0, 1, 1], [], []>} : vector<16x27xf32>, vector<27x512xf32>, vector<16x512xf32> -> vector<16x512xf32>
    %c0_3 = arith.constant 0 : index
    %c0_4 = arith.constant 0 : index
    %12 = vector.load %arg3[%c0_3, %c0_4] : memref<1x256xf32, #tpu.memory_space<vmem>>, vector<1x256xf32>
    %13 = vector.extract_strided_slice %11 {offsets = [0, 0], sizes = [16, 256], strides = [1, 1]} : vector<16x512xf32> to vector<16x256xf32>
    %14 = vector.broadcast %12 : vector<1x256xf32> to vector<16x256xf32>
    %15 = arith.mulf %13, %14 : vector<16x256xf32>
    %cst_5 = arith.constant dense<0.000000e+00> : vector<16xf32>
    %16 = vector.multi_reduction <add>, %15, %cst_5 [1] : vector<16x256xf32> to vector<16xf32>
    %17 = vector.shape_cast %16 : vector<16xf32> to vector<16x1xf32>
    %cst_6 = arith.constant 0.00510204071 : f32
    %18 = vector.broadcast %cst_6 : f32 to vector<16x1xf32>
    %19 = arith.mulf %17, %18 : vector<16x1xf32>
    %20 = vector.broadcast %19 : vector<16x1xf32> to vector<16x256xf32>
    %21 = arith.subf %13, %20 : vector<16x256xf32>
    %22 = arith.mulf %21, %21 : vector<16x256xf32>
    %23 = vector.broadcast %12 : vector<1x256xf32> to vector<16x256xf32>
    %24 = arith.mulf %22, %23 : vector<16x256xf32>
    %cst_7 = arith.constant dense<0.000000e+00> : vector<16xf32>
    %25 = vector.multi_reduction <add>, %24, %cst_7 [1] : vector<16x256xf32> to vector<16xf32>
    %26 = vector.shape_cast %25 : vector<16xf32> to vector<16x1xf32>
    %cst_8 = arith.constant 0.00510204071 : f32
    %27 = vector.broadcast %cst_8 : f32 to vector<16x1xf32>
    %28 = arith.mulf %26, %27 : vector<16x1xf32>
    %cst_9 = arith.constant 9.99999974E-6 : f32
    %29 = vector.broadcast %cst_9 : f32 to vector<16x1xf32>
    %30 = arith.addf %28, %29 : vector<16x1xf32>
    %31 = math.rsqrt %30 : vector<16x1xf32>
    %cst_10 = arith.constant 5.000000e-01 : f32
    %32 = vector.broadcast %cst_10 : f32 to vector<16x1xf32>
    %33 = arith.mulf %31, %32 : vector<16x1xf32>
    %34 = vector.broadcast %33 : vector<16x1xf32> to vector<16x256xf32>
    %35 = arith.mulf %21, %34 : vector<16x256xf32>
    %c0_11 = arith.constant 0 : index
    %c0_12 = arith.constant 0 : index
    %c0_13 = arith.constant 0 : index
    %36 = vector.load %arg4[%c0_11, %c0_12, %c0_13] : memref<2x16x256xf32, #tpu.memory_space<vmem>>, vector<1x16x256xf32>
    %37 = vector.shape_cast %36 : vector<1x16x256xf32> to vector<16x256xf32>
    %38 = vector.shape_cast %35 : vector<16x256xf32> to vector<1x16x256xf32>
    tpu.vector_store %arg4[%c0_11, %c0_12, %c0_13], %38 {strides = array<i32>} : memref<2x16x256xf32, #tpu.memory_space<vmem>>, vector<1x16x256xf32>,
    %39 = vector.extract_strided_slice %11 {offsets = [0, 256], sizes = [16, 256], strides = [1, 1]} : vector<16x512xf32> to vector<16x256xf32>
    %40 = vector.broadcast %12 : vector<1x256xf32> to vector<16x256xf32>
    %41 = arith.mulf %39, %40 : vector<16x256xf32>
    %cst_14 = arith.constant dense<0.000000e+00> : vector<16xf32>
    %42 = vector.multi_reduction <add>, %41, %cst_14 [1] : vector<16x256xf32> to vector<16xf32>
    %43 = vector.shape_cast %42 : vector<16xf32> to vector<16x1xf32>
    %cst_15 = arith.constant 0.00510204071 : f32
    %44 = vector.broadcast %cst_15 : f32 to vector<16x1xf32>
    %45 = arith.mulf %43, %44 : vector<16x1xf32>
    %46 = vector.broadcast %45 : vector<16x1xf32> to vector<16x256xf32>
    %47 = arith.subf %39, %46 : vector<16x256xf32>
    %48 = arith.mulf %47, %47 : vector<16x256xf32>
    %49 = vector.broadcast %12 : vector<1x256xf32> to vector<16x256xf32>
    %50 = arith.mulf %48, %49 : vector<16x256xf32>
    %cst_16 = arith.constant dense<0.000000e+00> : vector<16xf32>
    %51 = vector.multi_reduction <add>, %50, %cst_16 [1] : vector<16x256xf32> to vector<16xf32>
    %52 = vector.shape_cast %51 : vector<16xf32> to vector<16x1xf32>
    %cst_17 = arith.constant 0.00510204071 : f32
    %53 = vector.broadcast %cst_17 : f32 to vector<16x1xf32>
    %54 = arith.mulf %52, %53 : vector<16x1xf32>
    %cst_18 = arith.constant 9.99999974E-6 : f32
    %55 = vector.broadcast %cst_18 : f32 to vector<16x1xf32>
    %56 = arith.addf %54, %55 : vector<16x1xf32>
    %57 = math.rsqrt %56 : vector<16x1xf32>
    %cst_19 = arith.constant 5.000000e-01 : f32
    %58 = vector.broadcast %cst_19 : f32 to vector<16x1xf32>
    %59 = arith.mulf %57, %58 : vector<16x1xf32>
    %60 = vector.broadcast %59 : vector<16x1xf32> to vector<16x256xf32>
    %61 = arith.mulf %47, %60 : vector<16x256xf32>
    %c1 = arith.constant 1 : index
    %c0_20 = arith.constant 0 : index
    %c0_21 = arith.constant 0 : index
    %62 = vector.load %arg4[%c1, %c0_20, %c0_21] : memref<2x16x256xf32, #tpu.memory_space<vmem>>, vector<1x16x256xf32>
    %63 = vector.shape_cast %62 : vector<1x16x256xf32> to vector<16x256xf32>
    %64 = vector.shape_cast %61 : vector<16x256xf32> to vector<1x16x256xf32>
    tpu.vector_store %arg4[%c1, %c0_20, %c0_21], %64 {strides = array<i32>} : memref<2x16x256xf32, #tpu.memory_space<vmem>>, vector<1x16x256xf32>,
    return
  }
  func.func @transform_0(%arg0: i32) -> (i32, i32) {
    %c0_i32 = arith.constant 0 : i32
    %c0_i32_0 = arith.constant 0 : i32
    return %c0_i32, %arg0 : i32, i32
  }
  func.func @transform_1(%arg0: i32) -> (i32, i32) {
    %c0_i32 = arith.constant 0 : i32
    %c0_i32_0 = arith.constant 0 : i32
    %c0_i32_1 = arith.constant 0 : i32
    return %c0_i32, %c0_i32_0 : i32, i32
  }
  func.func @transform_2(%arg0: i32) -> (i32, i32) {
    %c0_i32 = arith.constant 0 : i32
    %c0_i32_0 = arith.constant 0 : i32
    %c0_i32_1 = arith.constant 0 : i32
    return %c0_i32, %c0_i32_0 : i32, i32
  }
  func.func @transform_3(%arg0: i32) -> (i32, i32, i32) {
    %c0_i32 = arith.constant 0 : i32
    %c0_i32_0 = arith.constant 0 : i32
    %c0_i32_1 = arith.constant 0 : i32
    return %arg0, %c0_i32, %c0_i32_0 : i32, i32, i32
  }
}

</mosaic_0001>

<llo_original>
// kernel: tpu_custom_call.1
$region0: #{tpu_custom_call.1}
  #allocation0 [shape = 'u32[]', space=smem, size = 0x4, offset = 0x4, fixed_abs, tag = 'smem constant byte address 0x4 - core index']
  #allocation1 [shape = 'u32[72,128]{1,0:T(1,128)}', space=vmem, size = 0x9000, scoped, tag = 'internal scratch']
  %s0 = inlined_call_operand.hbm [shape: f32[3,2048], index: 0, kind: input, shape index: {}]
  %s1 = inlined_call_operand.hbm [shape: f32[16,27], index: 1, kind: input, shape index: {}]
  %s2 = inlined_call_operand.hbm [shape: f32[1,256], index: 2, kind: input, shape index: {}]
  %s3 = inlined_call_operand.hbm [shape: f32[8,16,256], index: 3, kind: output, shape index: {}]
  %s4 = sld [smem:[#allocation0]]
  $region57: #{tpu_custom_call.1} parent=0
    _
  %s6 = ssub.s32 1, %s4
  %s7 = scalar_select 0, %s6, %s4
  $region1: #{tpu_custom_call.1} parent=0
    #allocation2 [shape = 'u8[16384]{0}', space=vmem, size = 0x4000, scoped, tag = 'input window, operand 0']
    #allocation3 [shape = 's32[2]{0}', space=sflag, size = 0x8, scoped, tag = 'scoped memory for tpu_custom_call.1']
    #allocation4 [shape = 's32[2]{0}', space=sflag, size = 0x8, scoped, tag = 'scoped memory for tpu_custom_call.1']
    #allocation5 [shape = 'u8[8192]{0}', space=vmem, size = 0x2000, scoped, tag = 'input window, operand 1, single buffered']
    #allocation6 [shape = 's32[1]{0}', space=sflag, size = 0x4, scoped, tag = 'scoped memory for tpu_custom_call.1']
    #allocation7 [shape = 'u8[1024]{0}', space=vmem, size = 0x400, scoped, tag = 'input window, operand 2, single buffered']
    #allocation8 [shape = 'u8[65536]{0}', space=vmem, size = 0x10000, scoped, tag = 'output window, operand 0']
    %8 = vsyncpa [#allocation3], 0
    %s9 = scalar_lea.sflag [#allocation3], 1
    %10 = vsyncpa %s9, 0
    %11 = vsyncpa [#allocation6], 0
    %12 = vsyncpa [#allocation4], 0
    %s13 = scalar_lea.sflag [#allocation4], 1
    %14 = vsyncpa %s13, 0
    loop: start=0, step=1, limit=6
    $region2: #{tpu_custom_call.1} parent=1 // loop_pre_header
      _
    $region3: #{tpu_custom_call.1} parent=1 // loop_header
      %s16 = sphi 0, %s20
      %p17 = scmp.ge.s32.totalorder %s16, 6
      %s26 = sphi 0, %s28
      %s29 = sphi 0, %s26
      %s30 = sphi 0, %s29
      %s46 = sphi 0, %s30
      %s50 = sphi 0, %s50
      %s52 = sphi 0, %s50
      %s53 = sphi 0, %s52
      %s67 = sphi 0, %s53
      %s71 = sphi 0, %s71
      %s73 = sphi 0, %s71
      %s74 = sphi 0, %s73
      %s88 = sphi 0, %s74
      %s94 = sphi 0, %s96
      %s97 = sphi 0, %s94
      %s98 = sphi 0, %s97
      %s114 = sphi 0, %s98
    $region4: #{tpu_custom_call.1} parent=1 // loop_header_branch
      %19 = sbr.rel (%p17) target = $region8
    $region5: #{tpu_custom_call.1} parent=1 // loop_body
      %s21 = ssub.s32 %s16, 1
      %s22 = ssub.s32 %s16, 2
      %s23 = sadd.s32 %s16, 1
      %s24 = ssub.s32 %s16, %s23
      %p25 = scmp.eq.s32.totalorder %s24, 0
      %s27 = sadd.s32 %s26, 1
      %s28 = scalar_select %p25, %s26, %s27
      %p31 = pneg %p25
      %p32 = scmp.eq.s32.totalorder %s16, 3
      %p33 = por %p31, %p32
      %p34 = scmp.ne.s32.totalorder %s26, %s29
      %p35 = scmp.eq.s32.totalorder %s16, 0
      %p36 = por %p34, %p35
      %p37 = scmp.ne.s32.totalorder %s26, %s29
      %p38 = scmp.eq.s32.totalorder %s21, 3
      %p39 = por %p37, %p38
      %p40 = scmp.ne.s32.totalorder %s29, %s30
      %p41 = scmp.eq.s32.totalorder %s21, 0
      %p42 = por %p40, %p41
      %p43 = scmp.ne.s32.totalorder %s29, %s30
      %p44 = scmp.eq.s32.totalorder %s22, 3
      %p45 = por %p43, %p44
      %p47 = scmp.ne.s32.totalorder %s30, %s46
      %p48 = scmp.eq.s32.totalorder %s22, 0
      %p49 = por %p47, %p48
      %s51 = sadd.s32 %s50, 1
      %p54 = scmp.eq.s32.totalorder %s16, 3
      %p55 = scmp.ne.s32.totalorder %s50, %s52
      %p56 = scmp.eq.s32.totalorder %s16, 0
      %p57 = por %p55, %p56
      %p58 = scmp.ne.s32.totalorder %s50, %s52
      %p59 = scmp.eq.s32.totalorder %s21, 3
      %p60 = por %p58, %p59
      %p61 = scmp.ne.s32.totalorder %s52, %s53
      %p62 = scmp.eq.s32.totalorder %s21, 0
      %p63 = por %p61, %p62
      %p64 = scmp.ne.s32.totalorder %s52, %s53
      %p65 = scmp.eq.s32.totalorder %s22, 3
      %p66 = por %p64, %p65
      %p68 = scmp.ne.s32.totalorder %s53, %s67
      %p69 = scmp.eq.s32.totalorder %s22, 0
      %p70 = por %p68, %p69
      %s72 = sadd.s32 %s71, 1
      %p75 = scmp.eq.s32.totalorder %s16, 3
      %p76 = scmp.ne.s32.totalorder %s71, %s73
      %p77 = scmp.eq.s32.totalorder %s16, 0
      %p78 = por %p76, %p77
      %p79 = scmp.ne.s32.totalorder %s71, %s73
      %p80 = scmp.eq.s32.totalorder %s21, 3
      %p81 = por %p79, %p80
      %p82 = scmp.ne.s32.totalorder %s73, %s74
      %p83 = scmp.eq.s32.totalorder %s21, 0
      %p84 = por %p82, %p83
      %p85 = scmp.ne.s32.totalorder %s73, %s74
      %p86 = scmp.eq.s32.totalorder %s22, 3
      %p87 = por %p85, %p86
      %p89 = scmp.ne.s32.totalorder %s74, %s88
      %p90 = scmp.eq.s32.totalorder %s22, 0
      %p91 = por %p89, %p90
      %s92 = ssub.s32 %s16, %s23
      %p93 = scmp.eq.s32.totalorder %s92, 0
      %s95 = sadd.s32 %s94, 1
      %s96 = scalar_select %p93, %s94, %s95
      %p99 = pneg %p93
      %p100 = scmp.eq.s32.totalorder %s16, 3
      %p101 = por %p99, %p100
      %p102 = scmp.ne.s32.totalorder %s94, %s97
      %p103 = scmp.eq.s32.totalorder %s16, 0
      %p104 = por %p102, %p103
      %p105 = scmp.ne.s32.totalorder %s94, %s97
      %p106 = scmp.eq.s32.totalorder %s21, 3
      %p107 = por %p105, %p106
      %p108 = scmp.ne.s32.totalorder %s97, %s98
      %p109 = scmp.eq.s32.totalorder %s21, 0
      %p110 = por %p108, %p109
      %p111 = scmp.ne.s32.totalorder %s97, %s98
      %p112 = scmp.eq.s32.totalorder %s22, 3
      %p113 = por %p111, %p112
      %p115 = scmp.ne.s32.totalorder %s98, %s114
      %p116 = scmp.eq.s32.totalorder %s22, 0
      %p117 = por %p115, %p116
      %p118 = scmp.le.s32.totalorder 1, %s16
      %p119 = scmp.lt.s32.totalorder %s16, 5
      %p120 = pnand %p118, %p119
      %p121 = pneg %p120
      // Predicated region
      $region9: #{tpu_custom_call.1} parent=5 // pred_check
        _
      $region10: #{tpu_custom_call.1} parent=5 // pred_check_branch
        %123 = sbr.rel (%p120) target = $region12
      $region11: #{tpu_custom_call.1} parent=5 // pred_region
        %s124 = ssub.s32 %s16, 1
        // Predicated region
        $region13: #{tpu_custom_call.1} parent=11 // pred_check
          %p125 = pneg %p63
        $region14: #{tpu_custom_call.1} parent=11 // pred_check_branch
          %127 = sbr.rel (%p125) target = $region16
        $region15: #{tpu_custom_call.1} parent=11 // pred_region
          %129 = vsyncadd [#allocation6], 0
          %s130 = sshll.u32 %s1, 4
          %s131 = int_to_ptr.hbm [resolvable:$true] %s130
          %s132 = sshll.u32 [#allocation5], 4
          %s133 = int_to_ptr.vmem [resolvable:$true] %s132
          %138 = dma.hbm_to_vmem [thread:$0]  %s131, 256, %s133, [#allocation6], 128, 128, 8
        $region16: #{tpu_custom_call.1} parent=11 // pred_fallthru
          _
        // Predicated region
        $region17: #{tpu_custom_call.1} parent=11 // pred_check
          %p139 = pneg %p84
        $region18: #{tpu_custom_call.1} parent=11 // pred_check_branch
          %141 = sbr.rel (%p139) target = $region20
        $region19: #{tpu_custom_call.1} parent=11 // pred_region
          %143 = vsyncadd [#allocation6], 0
          %s145 = sshll.u32 %s2, 4
          %s146 = int_to_ptr.hbm [resolvable:$true] %s145
          %s147 = sshll.u32 [#allocation7], 4
          %s148 = int_to_ptr.vmem [resolvable:$true] %s147
          %150 = dma.hbm_to_vmem [thread:$0]  %s146, 32, %s148, [#allocation6]
        $region20: #{tpu_custom_call.1} parent=11 // pred_fallthru
          _
      $region12: #{tpu_custom_call.1} parent=5 // pred_fallthru
        _
      %p151 = scmp.lt.s32.totalorder %s16, 4
      // Predicated region
      $region21: #{tpu_custom_call.1} parent=5 // pred_check
        %p152 = pneg %p151
      $region22: #{tpu_custom_call.1} parent=5 // pred_check_branch
        %154 = sbr.rel (%p152) target = $region24
      $region23: #{tpu_custom_call.1} parent=5 // pred_region
        // Predicated region
        $region25: #{tpu_custom_call.1} parent=23 // pred_check
          %p155 = pneg %p36
        $region26: #{tpu_custom_call.1} parent=23 // pred_check_branch
          %157 = sbr.rel (%p155) target = $region28
        $region27: #{tpu_custom_call.1} parent=23 // pred_region
          %s158 = sand.u32 %s26, 1
          %s159 = scalar_lea.sflag [#allocation3], %s158
          %s160 = sand.u32 %s26, 1
          %s161 = smul.addr %s160, 16
          %s162 = scalar_lea.vmem [#allocation2], %s161
          %s163 = smul.u32 4, %s16
          %165 = vsyncadd %s159, 0
          %s166 = smul.addr %s163, 4
          %s167 = scalar_lea.hbm %s0, %s166
          %s169 = sshll.u32 %s167, 4
          %s170 = int_to_ptr.hbm [resolvable:$true] %s169
          %s171 = sshll.u32 %s162, 4
          %s172 = int_to_ptr.vmem [resolvable:$true] %s171
          %174 = dma.hbm_to_vmem [thread:$0]  %s170, 256, %s172, %s159
        $region28: #{tpu_custom_call.1} parent=23 // pred_fallthru
          _
      $region24: #{tpu_custom_call.1} parent=5 // pred_fallthru
        _
      %p175 = scmp.le.s32.totalorder 1, %s16
      %p176 = scmp.lt.s32.totalorder %s16, 5
      %p177 = pnand %p175, %p176
      %p178 = pneg %p177
      // Predicated region
      $region29: #{tpu_custom_call.1} parent=5 // pred_check
        _
      $region30: #{tpu_custom_call.1} parent=5 // pred_check_branch
        %180 = sbr.rel (%p177) target = $region32
      $region31: #{tpu_custom_call.1} parent=5 // pred_region
        %s181 = ssub.s32 %s16, 1
        %s182 = sand.u32 %s29, 1
        %s183 = scalar_lea.sflag [#allocation3], %s182
        %s184 = sand.u32 %s29, 1
        %s185 = smul.addr %s184, 16
        %s186 = scalar_lea.vmem [#allocation2], %s185
        // Predicated region
        $region33: #{tpu_custom_call.1} parent=31 // pred_check
          %p187 = pneg %p42
        $region34: #{tpu_custom_call.1} parent=31 // pred_check_branch
          %189 = sbr.rel (%p187) target = $region36
        $region35: #{tpu_custom_call.1} parent=31 // pred_region
          %191 = dma.done %s183, 256
        $region36: #{tpu_custom_call.1} parent=31 // pred_fallthru
          _
        // Predicated region
        $region37: #{tpu_custom_call.1} parent=31 // pred_check
          %p192 = pneg %p63
        $region38: #{tpu_custom_call.1} parent=31 // pred_check_branch
          %194 = sbr.rel (%p192) target = $region40
        $region39: #{tpu_custom_call.1} parent=31 // pred_region
          %196 = dma.done [#allocation6], 256
        $region40: #{tpu_custom_call.1} parent=31 // pred_fallthru
          _
        // Predicated region
        $region41: #{tpu_custom_call.1} parent=31 // pred_check
          %p197 = pneg %p84
        $region42: #{tpu_custom_call.1} parent=31 // pred_check_branch
          %199 = sbr.rel (%p197) target = $region44
        $region43: #{tpu_custom_call.1} parent=31 // pred_region
          %201 = dma.done [#allocation6], 32
        $region44: #{tpu_custom_call.1} parent=31 // pred_fallthru
          _
        %s202 = sand.u32 %s29, 1
        %s203 = scalar_lea.sflag [#allocation3], %s202
        %s204 = sand.u32 %s29, 1
        %s205 = smul.addr %s204, 16
        %s206 = scalar_lea.vmem [#allocation2], %s205
        %p207 = pneg %p42
        %p208 = pneg %p39
        %p209 = pneg %p63
        %p210 = pneg %p60
        %p211 = pneg %p84
        %p212 = pneg %p81
        %p213 = pneg %p110
        %p214 = pneg %p107
        %s215 = sand.u32 %s97, 1
        %s216 = scalar_lea.sflag [#allocation4], %s215
        %s217 = sand.u32 %s97, 1
        %s218 = smul.addr %s217, 64
        %s219 = scalar_lea.vmem [#allocation8], %s218
        %s220 = smul.u32 4, %s21
        %s221 = smul.u32 2, %s21
        %v222 = vld [vmem:[%s186] sm:$0x77]
        %v223 = vld [vmem:[%s186 + $0x8] sm:$0x77]
        %226 = vst [vmem:[#allocation1] ss:$2 sm:$0xff] %v222
        %s227 = scalar_lea.vmem [#allocation1], 16
        %228 = vst [vmem:[%s227] ss:$2 sm:$0xff] %v223
        %v229 = vld.sshfl [vmem:[#allocation1] sm:$0xff pattern:$0x75316420]
        %v230 = vld.sshfl [vmem:[#allocation1 + $0x8] sm:$0xff pattern:$0x75316420]
        %v231 = vld.sshfl [vmem:[#allocation1 + $0x10] sm:$0xff pattern:$0x75316420]
        %v232 = vld.sshfl [vmem:[#allocation1 + $0x18] sm:$0xff pattern:$0x75316420]
        %237 = vrot.lane.b32.xlu0 %v229, 127
        %v238 = vpop.permute.xlu0 %237
        %239 = vrot.lane.b32.xlu0 %v230, 127
        %v240 = vpop.permute.xlu0 %239
        %241 = vrot.lane.b32.xlu0 %v231, 127
        %v242 = vpop.permute.xlu0 %241
        %243 = vrot.lane.b32.xlu0 %v232, 127
        %v244 = vpop.permute.xlu0 %243
        %v245 = vlaneseq
        %v246 = vand.u32 %v245, 127
        %vm247 = vcmp.lt.s32.totalorder %v246, 127
        %v248 = vsel %vm247, %v242, %v244
        %v249 = vsel %vm247, %v240, %v242
        %v250 = vsel %vm247, %v238, %v240
        %v251 = vsel %vm247, %v244, %v238
        %252 = vst [vmem:[#allocation1] ss:$2 sm:$0xff] %v222
        %s253 = scalar_lea.vmem [#allocation1], 16
        %254 = vst [vmem:[%s253] ss:$2 sm:$0xff] %v223
        %v255 = vld.sshfl [vmem:[#allocation1] sm:$0xff pattern:$0x75316420]
        %v256 = vld.sshfl [vmem:[#allocation1 + $0x8] sm:$0xff pattern:$0x75316420]
        %v257 = vld.sshfl [vmem:[#allocation1 + $0x10] sm:$0xff pattern:$0x75316420]
        %v258 = vld.sshfl [vmem:[#allocation1 + $0x18] sm:$0xff pattern:$0x75316420]
        %263 = vrot.lane.b32.xlu0 %v255, 126
        %v264 = vpop.permute.xlu0 %263
        %265 = vrot.lane.b32.xlu0 %v256, 126
        %v266 = vpop.permute.xlu0 %265
        %267 = vrot.lane.b32.xlu0 %v257, 126
        %v268 = vpop.permute.xlu0 %267
        %269 = vrot.lane.b32.xlu0 %v258, 126
        %v270 = vpop.permute.xlu0 %269
        %vm271 = vcmp.lt.s32.totalorder %v246, 126
        %v272 = vsel %vm271, %v268, %v270
        %v273 = vsel %vm271, %v266, %v268
        %v274 = vsel %vm271, %v264, %v266
        %v275 = vsel %vm271, %v270, %v264
        %276 = vst [vmem:[#allocation1] ss:$2 sm:$0xff] %v222
        %s277 = scalar_lea.vmem [#allocation1], 16
        %278 = vst [vmem:[%s277] ss:$2 sm:$0xff] %v223
        %v279 = vld.sshfl [vmem:[#allocation1] sm:$0xff pattern:$0x75316420]
        %v280 = vld.sshfl [vmem:[#allocation1 + $0x8] sm:$0xff pattern:$0x75316420]
        %v281 = vld.sshfl [vmem:[#allocation1 + $0x10] sm:$0xff pattern:$0x75316420]
        %v282 = vld.sshfl [vmem:[#allocation1 + $0x18] sm:$0xff pattern:$0x75316420]
        %287 = vrot.lane.b32.xlu0 %v279, 112
        %v288 = vpop.permute.xlu0 %287
        %289 = vrot.lane.b32.xlu0 %v280, 112
        %v290 = vpop.permute.xlu0 %289
        %291 = vrot.lane.b32.xlu0 %v281, 112
        %v292 = vpop.permute.xlu0 %291
        %293 = vrot.lane.b32.xlu0 %v282, 112
        %v294 = vpop.permute.xlu0 %293
        %vm295 = vcmp.lt.s32.totalorder %v246, 112
        %v296 = vsel %vm295, %v292, %v294
        %v297 = vsel %vm295, %v290, %v292
        %v298 = vsel %vm295, %v288, %v290
        %v299 = vsel %vm295, %v294, %v288
        %300 = vst [vmem:[#allocation1] ss:$2 sm:$0xff] %v222
        %s301 = scalar_lea.vmem [#allocation1], 16
        %302 = vst [vmem:[%s301] ss:$2 sm:$0xff] %v223
        %v303 = vld.sshfl [vmem:[#allocation1] sm:$0xff pattern:$0x75316420]
        %v304 = vld.sshfl [vmem:[#allocation1 + $0x8] sm:$0xff pattern:$0x75316420]
        %v305 = vld.sshfl [vmem:[#allocation1 + $0x10] sm:$0xff pattern:$0x75316420]
        %v306 = vld.sshfl [vmem:[#allocation1 + $0x18] sm:$0xff pattern:$0x75316420]
        %311 = vrot.lane.b32.xlu0 %v303, 111
        %v312 = vpop.permute.xlu0 %311
        %313 = vrot.lane.b32.xlu0 %v304, 111
        %v314 = vpop.permute.xlu0 %313
        %315 = vrot.lane.b32.xlu0 %v305, 111
        %v316 = vpop.permute.xlu0 %315
        %317 = vrot.lane.b32.xlu0 %v306, 111
        %v318 = vpop.permute.xlu0 %317
        %vm319 = vcmp.lt.s32.totalorder %v246, 111
        %v320 = vsel %vm319, %v316, %v318
        %v321 = vsel %vm319, %v314, %v316
        %v322 = vsel %vm319, %v312, %v314
        %v323 = vsel %vm319, %v318, %v312
        %324 = vst [vmem:[#allocation1] ss:$2 sm:$0xff] %v222
        %s325 = scalar_lea.vmem [#allocation1], 16
        %326 = vst [vmem:[%s325] ss:$2 sm:$0xff] %v223
        %v327 = vld.sshfl [vmem:[#allocation1] sm:$0xff pattern:$0x75316420]
        %v328 = vld.sshfl [vmem:[#allocation1 + $0x8] sm:$0xff pattern:$0x75316420]
        %v329 = vld.sshfl [vmem:[#allocation1 + $0x10] sm:$0xff pattern:$0x75316420]
        %v330 = vld.sshfl [vmem:[#allocation1 + $0x18] sm:$0xff pattern:$0x75316420]
        %335 = vrot.lane.b32.xlu0 %v327, 110
        %v336 = vpop.permute.xlu0 %335
        %337 = vrot.lane.b32.xlu0 %v328, 110
        %v338 = vpop.permute.xlu0 %337
        %339 = vrot.lane.b32.xlu0 %v329, 110
        %v340 = vpop.permute.xlu0 %339
        %341 = vrot.lane.b32.xlu0 %v330, 110
        %v342 = vpop.permute.xlu0 %341
        %vm343 = vcmp.lt.s32.totalorder %v246, 110
        %v344 = vsel %vm343, %v340, %v342
        %v345 = vsel %vm343, %v338, %v340
        %v346 = vsel %vm343, %v336, %v338
        %v347 = vsel %vm343, %v342, %v336
        %348 = vst [vmem:[#allocation1] ss:$2 sm:$0xff] %v222
        %s349 = scalar_lea.vmem [#allocation1], 16
        %350 = vst [vmem:[%s349] ss:$2 sm:$0xff] %v223
        %v351 = vld.sshfl [vmem:[#allocation1] sm:$0xff pattern:$0x75316420]
        %v352 = vld.sshfl [vmem:[#allocation1 + $0x8] sm:$0xff pattern:$0x75316420]
        %v353 = vld.sshfl [vmem:[#allocation1 + $0x10] sm:$0xff pattern:$0x75316420]
        %v354 = vld.sshfl [vmem:[#allocation1 + $0x18] sm:$0xff pattern:$0x75316420]
        %359 = vrot.lane.b32.xlu0 %v351, 96
        %v360 = vpop.permute.xlu0 %359
        %361 = vrot.lane.b32.xlu0 %v352, 96
        %v362 = vpop.permute.xlu0 %361
        %363 = vrot.lane.b32.xlu0 %v353, 96
        %v364 = vpop.permute.xlu0 %363
        %365 = vrot.lane.b32.xlu0 %v354, 96
        %v366 = vpop.permute.xlu0 %365
        %vm367 = vcmp.lt.s32.totalorder %v246, 96
        %v368 = vsel %vm367, %v364, %v366
        %v369 = vsel %vm367, %v362, %v364
        %v370 = vsel %vm367, %v360, %v362
        %v371 = vsel %vm367, %v366, %v360
        %372 = vst [vmem:[#allocation1] ss:$2 sm:$0xff] %v222
        %s373 = scalar_lea.vmem [#allocation1], 16
        %374 = vst [vmem:[%s373] ss:$2 sm:$0xff] %v223
        %v375 = vld.sshfl [vmem:[#allocation1] sm:$0xff pattern:$0x75316420]
        %v376 = vld.sshfl [vmem:[#allocation1 + $0x8] sm:$0xff pattern:$0x75316420]
        %v377 = vld.sshfl [vmem:[#allocation1 + $0x10] sm:$0xff pattern:$0x75316420]
        %v378 = vld.sshfl [vmem:[#allocation1 + $0x18] sm:$0xff pattern:$0x75316420]
        %383 = vrot.lane.b32.xlu0 %v375, 95
        %v384 = vpop.permute.xlu0 %383
        %385 = vrot.lane.b32.xlu0 %v376, 95
        %v386 = vpop.permute.xlu0 %385
        %387 = vrot.lane.b32.xlu0 %v377, 95
        %v388 = vpop.permute.xlu0 %387
        %389 = vrot.lane.b32.xlu0 %v378, 95
        %v390 = vpop.permute.xlu0 %389
        %vm391 = vcmp.lt.s32.totalorder %v246, 95
        %v392 = vsel %vm391, %v388, %v390
        %v393 = vsel %vm391, %v386, %v388
        %v394 = vsel %vm391, %v384, %v386
        %v395 = vsel %vm391, %v390, %v384
        %396 = vst [vmem:[#allocation1] ss:$2 sm:$0xff] %v222
        %s397 = scalar_lea.vmem [#allocation1], 16
        %398 = vst [vmem:[%s397] ss:$2 sm:$0xff] %v223
        %v399 = vld.sshfl [vmem:[#allocation1] sm:$0xff pattern:$0x75316420]
        %v400 = vld.sshfl [vmem:[#allocation1 + $0x8] sm:$0xff pattern:$0x75316420]
        %v401 = vld.sshfl [vmem:[#allocation1 + $0x10] sm:$0xff pattern:$0x75316420]
        %v402 = vld.sshfl [vmem:[#allocation1 + $0x18] sm:$0xff pattern:$0x75316420]
        %407 = vrot.lane.b32.xlu0 %v399, 94
        %v408 = vpop.permute.xlu0 %407
        %409 = vrot.lane.b32.xlu0 %v400, 94
        %v410 = vpop.permute.xlu0 %409
        %411 = vrot.lane.b32.xlu0 %v401, 94
        %v412 = vpop.permute.xlu0 %411
        %413 = vrot.lane.b32.xlu0 %v402, 94
        %v414 = vpop.permute.xlu0 %413
        %vm415 = vcmp.lt.s32.totalorder %v246, 94
        %v416 = vsel %vm415, %v412, %v414
        %v417 = vsel %vm415, %v410, %v412
        %v418 = vsel %vm415, %v408, %v410
        %v419 = vsel %vm415, %v414, %v408
        %420 = vst [vmem:[#allocation1] ss:$2 sm:$0xff] %v222
        %s421 = scalar_lea.vmem [#allocation1], 16
        %422 = vst [vmem:[%s421] ss:$2 sm:$0xff] %v223
        %v423 = vld.sshfl [vmem:[#allocation1] sm:$0xff pattern:$0x75316420]
        %v424 = vld.sshfl [vmem:[#allocation1 + $0x8] sm:$0xff pattern:$0x75316420]
        %v425 = vld.sshfl [vmem:[#allocation1 + $0x10] sm:$0xff pattern:$0x75316420]
        %v426 = vld.sshfl [vmem:[#allocation1 + $0x18] sm:$0xff pattern:$0x75316420]
        %v435 = vrot.slane %v250, 5
        %v436 = vrot.slane %v249, 5
        %v437 = vrot.slane %v248, 5
        %v438 = vrot.slane %v251, 5
        %v447 = vrot.slane %v274, 2
        %v448 = vrot.slane %v273, 2
        %v449 = vrot.slane %v272, 2
        %v450 = vrot.slane %v275, 2
        %v459 = vrot.slane %v298, 7
        %v460 = vrot.slane %v297, 7
        %v461 = vrot.slane %v296, 7
        %v462 = vrot.slane %v299, 7
        %v471 = vrot.slane %v322, 4
        %v472 = vrot.slane %v321, 4
        %v473 = vrot.slane %v320, 4
        %v474 = vrot.slane %v323, 4
        %v483 = vrot.slane %v346, 1
        %v484 = vrot.slane %v345, 1
        %v485 = vrot.slane %v344, 1
        %v486 = vrot.slane %v347, 1
        %v495 = vrot.slane %v370, 6
        %v496 = vrot.slane %v369, 6
        %v497 = vrot.slane %v368, 6
        %v498 = vrot.slane %v371, 6
        %v507 = vrot.slane %v394, 3
        %v508 = vrot.slane %v393, 3
        %v509 = vrot.slane %v392, 3
        %v510 = vrot.slane %v395, 3
        %vm515 = vcmask 1042432
        %v516 = vsel %vm515, %v423, %v435
        %v517 = vsel %vm515, %v424, %v436
        %v518 = vsel %vm515, %v425, %v437
        %v519 = vsel %vm515, %v426, %v438
        %vm520 = vcmask 1045504
        %v521 = vsel %vm520, %v516, %v447
        %v522 = vsel %vm520, %v517, %v448
        %v523 = vsel %vm520, %v518, %v449
        %v524 = vsel %vm520, %v519, %v450
        %vm525 = vcmask 1040384
        %v526 = vsel %vm525, %v447, %v459
        %v527 = vsel %vm525, %v448, %v460
        %v528 = vsel %vm525, %v449, %v461
        %v529 = vsel %vm525, %v450, %v462
        %vm530 = vcmask 1043456
        %v531 = vsel %vm530, %v526, %v471
        %v532 = vsel %vm530, %v527, %v472
        %v533 = vsel %vm530, %v528, %v473
        %v534 = vsel %vm530, %v529, %v474
        %vm535 = vcmask 1046528
        %v536 = vsel %vm535, %v531, %v483
        %v537 = vsel %vm535, %v532, %v484
        %v538 = vsel %vm535, %v533, %v485
        %v539 = vsel %vm535, %v534, %v486
        %vm540 = vcmask 1041408
        %v541 = vsel %vm540, %v483, %v495
        %v542 = vsel %vm540, %v484, %v496
        %v543 = vsel %vm540, %v485, %v497
        %v544 = vsel %vm540, %v486, %v498
        %vm545 = vcmask 1044480
        %v546 = vsel %vm545, %v541, %v507
        %v547 = vsel %vm545, %v542, %v508
        %v548 = vsel %vm545, %v543, %v509
        %v549 = vsel %vm545, %v544, %v510
        %v550 = vld [vmem:[#allocation5] sm:$0xff]
        %v551 = vld [vmem:[#allocation5 + $0x8] sm:$0xff]
        %vm552 = vcmask 220160
        %v554 = vsel %vm552, %v550, 0
        %v557 = vsel %vm552, %v551, 0
        %v560 = vsel %vm515, %v418, 0
        %v563 = vsel %vm515, %v417, 0
        %v566 = vsel %vm515, %v416, 0
        %v569 = vsel %vm515, %v419, 0
        %571 = vmatpush.msra.mxu0 0.0
        %572 = vmatpush.msra.mxu0 0.0
        %573 = vmatpush.msra.mxu0 0.0
        %574 = vmatpush.msra.mxu0 0.0
        %575 = vmatpush.msra.mxu0 0.0
        %576 = vmatpush.msra.mxu0 0.0
        %577 = vmatpush.msra.mxu0 0.0
        %578 = vmatpush.msra.mxu0 0.0
        %579 = vmatpush.msra.mxu0 0.0
        %580 = vmatpush.msra.mxu0 0.0
        %581 = vmatpush.msra.mxu0 0.0
        %582 = vmatpush.msra.mxu0 0.0
        %583 = vmatpush.msra.mxu0 %v560
        %584 = vmatpush.msra.mxu0 %v546
        %585 = vmatpush.msra.mxu0 %v536
        %586 = vmatpush.msra.mxu0 %v521
        %587 = vmatmul.f32.gmra.mxu0 %v554
        %v588 = vpop.f32.mrf.mxu0
        %v589 = vadd.f32 0.0, %v588
        %590 = vmatmul.f32.gmra.mxu0 %v557
        %v591 = vpop.f32.mrf.mxu0
        %v592 = vadd.f32 0.0, %v591
        %593 = vdwg.mxu0
        %594 = vmatpush.msra.mxu0 0.0
        %595 = vmatpush.msra.mxu0 0.0
        %596 = vmatpush.msra.mxu0 0.0
        %597 = vmatpush.msra.mxu0 0.0
        %598 = vmatpush.msra.mxu0 0.0
        %599 = vmatpush.msra.mxu0 0.0
        %600 = vmatpush.msra.mxu0 0.0
        %601 = vmatpush.msra.mxu0 0.0
        %602 = vmatpush.msra.mxu0 0.0
        %603 = vmatpush.msra.mxu0 0.0
        %604 = vmatpush.msra.mxu0 0.0
        %605 = vmatpush.msra.mxu0 0.0
        %606 = vmatpush.msra.mxu0 %v563
        %607 = vmatpush.msra.mxu0 %v547
        %608 = vmatpush.msra.mxu0 %v537
        %609 = vmatpush.msra.mxu0 %v522
        %610 = vmatmul.f32.gmra.mxu0 %v554
        %v611 = vpop.f32.mrf.mxu0
        %v612 = vadd.f32 0.0, %v611
        %613 = vmatmul.f32.gmra.mxu0 %v557
        %v614 = vpop.f32.mrf.mxu0
        %v615 = vadd.f32 0.0, %v614
        %616 = vdwg.mxu0
        %617 = vmatpush.msra.mxu0 0.0
        %618 = vmatpush.msra.mxu0 0.0
        %619 = vmatpush.msra.mxu0 0.0
        %620 = vmatpush.msra.mxu0 0.0
        %621 = vmatpush.msra.mxu0 0.0
        %622 = vmatpush.msra.mxu0 0.0
        %623 = vmatpush.msra.mxu0 0.0
        %624 = vmatpush.msra.mxu0 0.0
        %625 = vmatpush.msra.mxu0 0.0
        %626 = vmatpush.msra.mxu0 0.0
        %627 = vmatpush.msra.mxu0 0.0
        %628 = vmatpush.msra.mxu0 0.0
        %629 = vmatpush.msra.mxu0 %v566
        %630 = vmatpush.msra.mxu0 %v548
        %631 = vmatpush.msra.mxu0 %v538
        %632 = vmatpush.msra.mxu0 %v523
        %633 = vmatmul.f32.gmra.mxu0 %v554
        %v634 = vpop.f32.mrf.mxu0
        %v635 = vadd.f32 0.0, %v634
        %636 = vmatmul.f32.gmra.mxu0 %v557
        %v637 = vpop.f32.mrf.mxu0
        %v638 = vadd.f32 0.0, %v637
        %639 = vdwg.mxu0
        %640 = vmatpush.msra.mxu0 0.0
        %641 = vmatpush.msra.mxu0 0.0
        %642 = vmatpush.msra.mxu0 0.0
        %643 = vmatpush.msra.mxu0 0.0
        %644 = vmatpush.msra.mxu0 0.0
        %645 = vmatpush.msra.mxu0 0.0
        %646 = vmatpush.msra.mxu0 0.0
        %647 = vmatpush.msra.mxu0 0.0
        %648 = vmatpush.msra.mxu0 0.0
        %649 = vmatpush.msra.mxu0 0.0
        %650 = vmatpush.msra.mxu0 0.0
        %651 = vmatpush.msra.mxu0 0.0
        %652 = vmatpush.msra.mxu0 %v569
        %653 = vmatpush.msra.mxu0 %v549
        %654 = vmatpush.msra.mxu0 %v539
        %655 = vmatpush.msra.mxu0 %v524
        %656 = vmatmul.f32.gmra.mxu0 %v554
        %v657 = vpop.f32.mrf.mxu0
        %v658 = vadd.f32 0.0, %v657
        %659 = vmatmul.f32.gmra.mxu0 %v557
        %v660 = vpop.f32.mrf.mxu0
        %v661 = vadd.f32 0.0, %v660
        %662 = vdwg.mxu0
        %v663 = vld [vmem:[#allocation7] sm:$0x3]
        %v665 = vperm.slane %v663, 0
        %v666 = vperm.slane %v663, 1
        %v669 = vmul.f32 %v589, %v665
        %v670 = vmul.f32 %v612, %v666
        %v671 = vmul.f32 %v592, %v665
        %v672 = vmul.f32 %v615, %v666
        %v673 = vadd.f32 %v669, %v670
        %674 = vadd.xlane.f32.xlu0 %v673
        %v675 = vpop.xlane.xlu0 %674
        %v676 = vadd.f32 %v671, %v672
        %677 = vadd.xlane.f32.xlu0 %v676
        %v678 = vpop.xlane.xlu0 %677
        %v679 = vmul.f32 %v675, 0.0051020407
        %v680 = vmul.f32 %v678, 0.0051020407
        %v681 = vsub.f32 %v589, %v679
        %v682 = vsub.f32 %v612, %v679
        %v683 = vsub.f32 %v592, %v680
        %v684 = vsub.f32 %v615, %v680
        %v685 = vmul.f32 %v681, %v681
        %v686 = vmul.f32 %v682, %v682
        %v687 = vmul.f32 %v683, %v683
        %v688 = vmul.f32 %v684, %v684
        %v689 = vmul.f32 %v685, %v665
        %v690 = vmul.f32 %v686, %v666
        %v691 = vmul.f32 %v687, %v665
        %v692 = vmul.f32 %v688, %v666
        %v693 = vadd.f32 %v689, %v690
        %694 = vadd.xlane.f32.xlu0 %v693
        %v695 = vpop.xlane.xlu0 %694
        %v696 = vadd.f32 %v691, %v692
        %697 = vadd.xlane.f32.xlu0 %v696
        %v698 = vpop.xlane.xlu0 %697
        %v699 = vmul.f32 %v695, 0.0051020407
        %v700 = vmul.f32 %v698, 0.0051020407
        %v701 = vadd.f32 %v699, 1e-05
        %v702 = vadd.f32 %v700, 1e-05
        %v703 = vrsqrt.pop %v701
        %v704 = vmul.f32 %v703, %v701
        %v705 = vmul.f32 %v704, %v703
        %v706 = vmul.f32 0.5, %v705
        %v707 = vsub.f32 1.5, %v706
        %v708 = vmul.f32 %v703, %v707
        %vm709 = vweird.f32 %v701
        %vm710 = vweird.f32 %v703
        %vm711 = vmor %vm709, %vm710
        %v712 = vsel %vm711, %v703, %v708
        %v713 = vrsqrt.pop %v702
        %v714 = vmul.f32 %v713, %v702
        %v715 = vmul.f32 %v714, %v713
        %v716 = vmul.f32 0.5, %v715
        %v717 = vsub.f32 1.5, %v716
        %v718 = vmul.f32 %v713, %v717
        %vm719 = vweird.f32 %v702
        %vm720 = vweird.f32 %v713
        %vm721 = vmor %vm719, %vm720
        %v722 = vsel %vm721, %v713, %v718
        %v723 = vmul.f32 %v712, 0.5
        %v724 = vmul.f32 %v722, 0.5
        %v725 = vmul.f32 %v681, %v723
        %v726 = vmul.f32 %v682, %v723
        %v727 = vmul.f32 %v683, %v724
        %v728 = vmul.f32 %v684, %v724
        %729 = vst [vmem:[%s219] sm:$0xff] %v725
        %730 = vst [vmem:[%s219 + $0x8] sm:$0xff] %v726
        %731 = vst [vmem:[%s219 + $0x10] sm:$0xff] %v727
        %732 = vst [vmem:[%s219 + $0x18] sm:$0xff] %v728
        %v733 = vmul.f32 %v635, %v665
        %v734 = vmul.f32 %v658, %v666
        %v735 = vmul.f32 %v638, %v665
        %v736 = vmul.f32 %v661, %v666
        %v737 = vadd.f32 %v733, %v734
        %738 = vadd.xlane.f32.xlu0 %v737
        %v739 = vpop.xlane.xlu0 %738
        %v740 = vadd.f32 %v735, %v736
        %741 = vadd.xlane.f32.xlu0 %v740
        %v742 = vpop.xlane.xlu0 %741
        %v743 = vmul.f32 %v739, 0.0051020407
        %v744 = vmul.f32 %v742, 0.0051020407
        %v745 = vsub.f32 %v635, %v743
        %v746 = vsub.f32 %v658, %v743
        %v747 = vsub.f32 %v638, %v744
        %v748 = vsub.f32 %v661, %v744
        %v749 = vmul.f32 %v745, %v745
        %v750 = vmul.f32 %v746, %v746
        %v751 = vmul.f32 %v747, %v747
        %v752 = vmul.f32 %v748, %v748
        %v753 = vmul.f32 %v749, %v665
        %v754 = vmul.f32 %v750, %v666
        %v755 = vmul.f32 %v751, %v665
        %v756 = vmul.f32 %v752, %v666
        %v757 = vadd.f32 %v753, %v754
        %758 = vadd.xlane.f32.xlu0 %v757
        %v759 = vpop.xlane.xlu0 %758
        %v760 = vadd.f32 %v755, %v756
        %761 = vadd.xlane.f32.xlu0 %v760
        %v762 = vpop.xlane.xlu0 %761
        %v763 = vmul.f32 %v759, 0.0051020407
        %v764 = vmul.f32 %v762, 0.0051020407
        %v765 = vadd.f32 %v763, 1e-05
        %v766 = vadd.f32 %v764, 1e-05
        %v767 = vrsqrt.pop %v765
        %v768 = vmul.f32 %v767, %v765
        %v769 = vmul.f32 %v768, %v767
        %v770 = vmul.f32 0.5, %v769
        %v771 = vsub.f32 1.5, %v770
        %v772 = vmul.f32 %v767, %v771
        %vm773 = vweird.f32 %v765
        %vm774 = vweird.f32 %v767
        %vm775 = vmor %vm773, %vm774
        %v776 = vsel %vm775, %v767, %v772
        %v777 = vrsqrt.pop %v766
        %v778 = vmul.f32 %v777, %v766
        %v779 = vmul.f32 %v778, %v777
        %v780 = vmul.f32 0.5, %v779
        %v781 = vsub.f32 1.5, %v780
        %v782 = vmul.f32 %v777, %v781
        %vm783 = vweird.f32 %v766
        %vm784 = vweird.f32 %v777
        %vm785 = vmor %vm783, %vm784
        %v786 = vsel %vm785, %v777, %v782
        %v787 = vmul.f32 %v776, 0.5
        %v788 = vmul.f32 %v786, 0.5
        %v789 = vmul.f32 %v745, %v787
        %v790 = vmul.f32 %v746, %v787
        %v791 = vmul.f32 %v747, %v788
        %v792 = vmul.f32 %v748, %v788
        %s793 = scalar_lea.vmem %s219, 32 [#allocation8]
        %794 = vst [vmem:[%s793] sm:$0xff] %v789
        %795 = vst [vmem:[%s793 + $0x8] sm:$0xff] %v790
        %796 = vst [vmem:[%s793 + $0x10] sm:$0xff] %v791
        %797 = vst [vmem:[%s793 + $0x18] sm:$0xff] %v792
        %s798 = sand.u32 %s97, 1
        %s799 = scalar_lea.sflag [#allocation4], %s798
        %s800 = sand.u32 %s97, 1
        %s801 = smul.addr %s800, 64
        %s802 = scalar_lea.vmem [#allocation8], %s801
        // Predicated region
        $region45: #{tpu_custom_call.1} parent=31 // pred_check
          %p803 = pneg %p107
        $region46: #{tpu_custom_call.1} parent=31 // pred_check_branch
          %805 = sbr.rel (%p803) target = $region48
        $region47: #{tpu_custom_call.1} parent=31 // pred_region
          %s806 = smul.u32 2, %s21
          %808 = vsyncadd %s799, 0
          %s809 = smul.addr %s806, 4
          %s810 = smul.addr %s809, 8
          %s811 = scalar_lea.hbm %s3, %s810
          %s812 = sshll.u32 %s802, 4
          %s813 = int_to_ptr.vmem [resolvable:$true] %s812
          %s814 = sshll.u32 %s811, 4
          %s815 = int_to_ptr.hbm [resolvable:$true] %s814
          %820 = dma.vmem_to_hbm [thread:$0]  %s813, 1024, %s815, %s799, 256, 256, 16
        $region48: #{tpu_custom_call.1} parent=31 // pred_fallthru
          _
      $region32: #{tpu_custom_call.1} parent=5 // pred_fallthru
        _
      %p821 = scmp.le.s32.totalorder 2, %s16
      // Predicated region
      $region49: #{tpu_custom_call.1} parent=5 // pred_check
        %p822 = pneg %p821
      $region50: #{tpu_custom_call.1} parent=5 // pred_check_branch
        %824 = sbr.rel (%p822) target = $region52
      $region51: #{tpu_custom_call.1} parent=5 // pred_region
        %s825 = ssub.s32 %s16, 2
        // Predicated region
        $region53: #{tpu_custom_call.1} parent=51 // pred_check
          %p826 = pneg %p113
        $region54: #{tpu_custom_call.1} parent=51 // pred_check_branch
          %828 = sbr.rel (%p826) target = $region56
        $region55: #{tpu_custom_call.1} parent=51 // pred_region
          %s829 = sand.u32 %s98, 1
          %s830 = scalar_lea.sflag [#allocation4], %s829
          %s831 = sand.u32 %s98, 1
          %s832 = smul.addr %s831, 64
          %s833 = scalar_lea.vmem [#allocation8], %s832
          %835 = dma.done %s830, 1024
        $region56: #{tpu_custom_call.1} parent=51 // pred_fallthru
          _
      $region52: #{tpu_custom_call.1} parent=5 // pred_fallthru
        _
    $region6: #{tpu_custom_call.1} parent=1 // loop_footer
      %s20 = sadd.s32 1, %s16
    $region7: #{tpu_custom_call.1} parent=1 // loop_footer_branch
      %15 = sbr.rel target = $region3
    $region8: #{tpu_custom_call.1} parent=1 // loop_exit
      _
    %836 = vsyncpa [#allocation3], 1
    %s837 = scalar_lea.sflag [#allocation3], 1
    %838 = vsyncpa %s837, 1
    %839 = vsyncpa [#allocation6], 1
    %840 = vsyncpa [#allocation4], 1
    %s841 = scalar_lea.sflag [#allocation4], 1
    %842 = vsyncpa %s841, 1

</llo_original>
